<compile_context>
chip_gen: v6e
topology: v6e:2x2x1
jax: 0.10.0
libtpu: 0.0.40
codegen_flags: <defaults>
</compile_context>

<pallas_src>
from functools import partial

import jax
import jax.numpy as jnp
import numpy as np
from jax.experimental import pallas as pl
from jax.experimental.pallas import tpu as pltpu


def _mlp_head_kernel(img_ref, txt_ref, w1_ref, b1_ref, w2_ref, b2_ref, out_ref):
    # Fused sum of the two embeddings (0.5 scale is pre-folded into W1).
    feats = (img_ref[...] + txt_ref[...]).astype(w1_ref.dtype)
    # fc1 + ReLU: bf16 MXU matmul with f32 accumulation, bias/ReLU in f32.
    h = jnp.dot(feats, w1_ref[...], preferred_element_type=jnp.float32)
    h = jnp.maximum(h + b1_ref[...], 0.0)
    # fc2: keep h in f32 (matches the PyTorch f32 reference; matmul is tiny).
    o = jnp.dot(h, w2_ref[...].astype(jnp.float32),
                preferred_element_type=jnp.float32)
    out_ref[...] = (o + b2_ref[...]).astype(out_ref.dtype)


def prepare_classifier_params(w1, b1, w2, b2, *, weight_dtype=jnp.bfloat16):
    """One-time weight prep (call at model init, NOT per forward).

    - Folds the (img+txt)/2 averaging scale into W1.
    - Casts weights to bf16 (halves the dominant W1 HBM traffic).
      (On v7x, fp8 would be the further-quantization option; int8 is v5e/v6e
       only — bf16 is the portable default used here.)
    - Pads fc2 output dim to a lane-dense multiple of 128 (unmasked stores).
    """
    E, H = w1.shape
    L = w2.shape[1]
    LP = max(128, ((L + 127) // 128) * 128)

    w1_c = (w1.astype(jnp.float32) * 0.5).astype(weight_dtype)
    w2_p = jnp.zeros((H, LP), weight_dtype).at[:, :L].set(w2.astype(weight_dtype))
    b1_2d = b1.reshape(1, H).astype(jnp.float32)
    b2_p = jnp.zeros((1, LP), jnp.float32).at[:, :L].set(
        b2.reshape(1, L).astype(jnp.float32))
    return w1_c, b1_2d, w2_p, b2_p, L


@partial(jax.jit, static_argnames=("num_labels",))
def medclip_mlp_classifier(image_features, text_features,
                           w1_c, b1_2d, w2_p, b2_p, *, num_labels):
    """Pallas forward: relu(((img+txt)/2) @ W1 + b1) @ W2 + b2.

    Weights must already be prepared by prepare_classifier_params().
    """
    B, E = image_features.shape
    H = w1_c.shape[1]
    LP = w2_p.shape[1]

    # Advisory cost so XLA can hoist/overlap the weight DMA under upstream
    # (encoder) compute when this jit is composed with the backbone.
    flops = 2 * B * E * H + 2 * B * H * LP
    bytes_accessed = (image_features.size * image_features.dtype.itemsize
                      + text_features.size * text_features.dtype.itemsize
                      + w1_c.size * w1_c.dtype.itemsize
                      + w2_p.size * w2_p.dtype.itemsize
                      + b1_2d.size * 4 + b2_p.size * 4
                      + B * LP * 4)

    vmem = pl.BlockSpec(memory_space=pltpu.MemorySpace.VMEM)
    out_padded = pl.pallas_call(
        _mlp_head_kernel,
        out_shape=jax.ShapeDtypeStruct((B, LP), jnp.float32),
        in_specs=[vmem] * 6,
        out_specs=vmem,
        cost_estimate=pl.CostEstimate(flops=flops, transcendentals=0,
                                      bytes_accessed=bytes_accessed),
    )(image_features, text_features, w1_c, b1_2d, w2_p, b2_p)
    return out_padded[:, :num_labels]


if __name__ == "__main__":
    # Module defaults: embedding_dim=512, hidden_dim=512, num_labels=14.
    B, E, H, L = 8, 512, 512, 14

    key = jax.random.PRNGKey(0)
    k_img, k_txt, k_w1, k_b1, k_w2, k_b2 = jax.random.split(key, 6)

    # Synthetic stand-ins for base_model.encode_image / encode_text outputs.
    image_features = jax.random.normal(k_img, (B, E), dtype=jnp.float32)
    text_features = jax.random.normal(k_txt, (B, E), dtype=jnp.float32)

    # PyTorch nn.Linear-style uniform init bounds.
    bound1 = 1.0 / np.sqrt(E)
    w1 = jax.random.uniform(k_w1, (E, H), jnp.float32, -bound1, bound1)
    b1 = jax.random.uniform(k_b1, (H,), jnp.float32, -bound1, bound1)
    bound2 = 1.0 / np.sqrt(H)
    w2 = jax.random.uniform(k_w2, (H, L), jnp.float32, -bound2, bound2)
    b2 = jax.random.uniform(k_b2, (L,), jnp.float32, -bound2, bound2)

    # One-time weight preparation (model init).
    w1_c, b1_2d, w2_p, b2_p, num_labels = prepare_classifier_params(w1, b1, w2, b2)
    jax.block_until_ready((w1_c, b1_2d, w2_p, b2_p))

    out = medclip_mlp_classifier(image_features, text_features,
                                 w1_c, b1_2d, w2_p, b2_p, num_labels=num_labels)
    out = jax.block_until_ready(out)
    assert out.shape == (B, L)

    # Reference in plain JAX mirroring the kernel's numerics
    # (bf16 W1 with folded 0.5 scale, f32 accumulation, f32 h for fc2).
    feats_sum = image_features + text_features
    h_ref = jnp.dot(feats_sum.astype(jnp.bfloat16), (w1 * 0.5).astype(jnp.bfloat16),
                    preferred_element_type=jnp.float32) + b1
    h_ref = jnp.maximum(h_ref, 0.0)
    ref = jnp.dot(h_ref, w2.astype(jnp.bfloat16).astype(jnp.float32),
                  preferred_element_type=jnp.float32) + b2
    np.testing.assert_allclose(np.asarray(out), np.asarray(ref),
                               rtol=2e-2, atol=2e-2)

    # Sanity check against the exact f32 PyTorch-semantics forward (loose tol,
    # bf16 weights introduce ~1e-2 relative error).
    feats_f32 = (image_features + text_features) * 0.5
    ref_f32 = jnp.maximum(feats_f32 @ w1 + b1, 0.0) @ w2 + b2
    np.testing.assert_allclose(np.asarray(out), np.asarray(ref_f32),
                               rtol=5e-2, atol=5e-2)
    print("KERNEL_OK")
</pallas_src>

<mosaic_0001>
module attributes {stable_mosaic.version = 11 : i64} {
  func.func @_mlp_head_kernel(%arg0: memref<8x512xf32, #tpu.memory_space<vmem>>, %arg1: memref<8x512xf32, #tpu.memory_space<vmem>>, %arg2: memref<512x512xbf16, #tpu.memory_space<vmem>>, %arg3: memref<1x512xf32, #tpu.memory_space<vmem>>, %arg4: memref<512x128xbf16, #tpu.memory_space<vmem>>, %arg5: memref<1x128xf32, #tpu.memory_space<vmem>>, %arg6: memref<8x128xf32, #tpu.memory_space<vmem>>) attributes {dimension_semantics = [], scalar_prefetch = 0 : i64, scratch_operands = 0 : i64, tpu.core_type = #tpu.core_type<tc>} {
    %c0 = arith.constant 0 : index
    %c0_0 = arith.constant 0 : index
    %0 = vector.load %arg0[%c0, %c0_0] : memref<8x512xf32, #tpu.memory_space<vmem>>, vector<8x512xf32>
    %c0_1 = arith.constant 0 : index
    %c0_2 = arith.constant 0 : index
    %1 = vector.load %arg1[%c0_1, %c0_2] : memref<8x512xf32, #tpu.memory_space<vmem>>, vector<8x512xf32>
    %2 = arith.addf %0, %1 : vector<8x512xf32>
    %3 = arith.truncf %2 : vector<8x512xf32> to vector<8x512xbf16>
    %c0_3 = arith.constant 0 : index
    %c0_4 = arith.constant 0 : index
    %4 = vector.load %arg2[%c0_3, %c0_4] : memref<512x512xbf16, #tpu.memory_space<vmem>>, vector<512x512xbf16>
    %cst = arith.constant dense<0.000000e+00> : vector<8x512xf32>
    %5 = tpu.matmul %3, %4, %cst {dimension_numbers = #tpu.dot_dimension_numbers<[1], [0], [0], [1], [0, 0, 1, 1], [], []>} : vector<8x512xbf16>, vector<512x512xbf16>, vector<8x512xf32> -> vector<8x512xf32>
    %c0_5 = arith.constant 0 : index
    %c0_6 = arith.constant 0 : index
    %6 = vector.load %arg3[%c0_5, %c0_6] : memref<1x512xf32, #tpu.memory_space<vmem>>, vector<1x512xf32>
    %7 = vector.broadcast %6 : vector<1x512xf32> to vector<8x512xf32>
    %8 = arith.addf %5, %7 : vector<8x512xf32>
    %cst_7 = arith.constant 0.000000e+00 : f32
    %9 = vector.broadcast %cst_7 : f32 to vector<8x512xf32>
    %10 = arith.maximumf %8, %9 : vector<8x512xf32>
    %c0_8 = arith.constant 0 : index
    %c0_9 = arith.constant 0 : index
    %11 = vector.load %arg4[%c0_8, %c0_9] : memref<512x128xbf16, #tpu.memory_space<vmem>>, vector<512x128xbf16>
    %12 = arith.extf %11 : vector<512x128xbf16> to vector<512x128xf32>
    %cst_10 = arith.constant dense<0.000000e+00> : vector<8x128xf32>
    %13 = tpu.matmul %10, %12, %cst_10 {dimension_numbers = #tpu.dot_dimension_numbers<[1], [0], [0], [1], [0, 0, 1, 1], [], []>} : vector<8x512xf32>, vector<512x128xf32>, vector<8x128xf32> -> vector<8x128xf32>
    %c0_11 = arith.constant 0 : index
    %c0_12 = arith.constant 0 : index
    %14 = vector.load %arg5[%c0_11, %c0_12] : memref<1x128xf32, #tpu.memory_space<vmem>>, vector<1x128xf32>
    %15 = vector.broadcast %14 : vector<1x128xf32> to vector<8x128xf32>
    %16 = arith.addf %13, %15 : vector<8x128xf32>
    %c0_13 = arith.constant 0 : index
    %c0_14 = arith.constant 0 : index
    %17 = vector.load %arg6[%c0_13, %c0_14] : memref<8x128xf32, #tpu.memory_space<vmem>>, vector<8x128xf32>
    tpu.vector_store %arg6[%c0_13, %c0_14], %16 {strides = array<i32>} : memref<8x128xf32, #tpu.memory_space<vmem>>, vector<8x128xf32>,
    return
  }
}

</mosaic_0001>

<llo_original>
// kernel: medclip_mlp_classifier.1
$region0: #{medclip_mlp_classifier.1}
  #allocation0 [shape = 'u32[]', space=smem, size = 0x4, offset = 0x4, fixed_abs, tag = 'smem constant byte address 0x4 - core index']
  #allocation1 [shape = 'u32[144,128]{1,0:T(1,128)}', space=vmem, size = 0x12000, scoped, tag = 'internal scratch']
  %s0 = inlined_call_operand.hbm [shape: f32[8,512], index: 0, kind: input, shape index: {}]
  %s1 = inlined_call_operand.hbm [shape: f32[8,512], index: 1, kind: input, shape index: {}]
  %s2 = inlined_call_operand.hbm [shape: bf16[512,512], index: 2, kind: input, shape index: {}]
  %s3 = inlined_call_operand.vmem [shape: f32[1,512], index: 3, kind: input, shape index: {}]
  %s4 = inlined_call_operand.hbm [shape: bf16[512,128], index: 4, kind: input, shape index: {}]
  %s5 = inlined_call_operand.vmem [shape: f32[1,128], index: 5, kind: input, shape index: {}]
  %s6 = inlined_call_operand.hbm [shape: f32[8,128], index: 6, kind: output, shape index: {}]
  %s7 = sld [smem:[#allocation0]]
  $region50: #{medclip_mlp_classifier.1} parent=0
    _
  %s9 = ssub.s32 1, %s7
  %s10 = scalar_select 0, %s9, %s7
  $region1: #{medclip_mlp_classifier.1} parent=0
    #allocation2 [shape = 'u8[16384]{0}', space=vmem, size = 0x4000, scoped, tag = 'input window, operand 0, single buffered']
    #allocation3 [shape = 's32[1]{0}', space=sflag, size = 0x4, scoped, tag = 'scoped memory for medclip_mlp_classifier.1']
    #allocation4 [shape = 's32[1]{0}', space=sflag, size = 0x4, scoped, tag = 'scoped memory for medclip_mlp_classifier.1']
    #allocation5 [shape = 'u8[16384]{0}', space=vmem, size = 0x4000, scoped, tag = 'input window, operand 1, single buffered']
    #allocation6 [shape = 's32[1]{0}', space=sflag, size = 0x4, scoped, tag = 'scoped memory for medclip_mlp_classifier.1']
    #allocation7 [shape = 'u8[524288]{0}', space=vmem, size = 0x80000, scoped, tag = 'input window, operand 2, single buffered']
    #allocation8 [shape = 'u8[131072]{0}', space=vmem, size = 0x20000, scoped, tag = 'input window, operand 4, single buffered']
    #allocation9 [shape = 's32[1]{0}', space=sflag, size = 0x4, scoped, tag = 'scoped memory for medclip_mlp_classifier.1']
    #allocation10 [shape = 'u8[4096]{0}', space=vmem, size = 0x1000, scoped, tag = 'output window, operand 0, single buffered']
    %11 = vsyncpa [#allocation3], 0
    %12 = vsyncpa [#allocation6], 0
    %13 = vsyncpa [#allocation9], 0
    %14 = vsyncpa [#allocation4], 0
    // Predicated region
    $region2: #{medclip_mlp_classifier.1} parent=1 // pred_check
      _
    $region3: #{medclip_mlp_classifier.1} parent=1 // pred_check_branch
      %16 = sbr.rel (0) target = $region5
    $region4: #{medclip_mlp_classifier.1} parent=1 // pred_region
      %s18 = ssub.s32 512, 512
      %19 = vsyncadd [#allocation3], %s18
      %s21 = sshll.u32 [#allocation2], 4
      %s22 = int_to_ptr.vmem [resolvable:$true] %s21
      %24 = dma.hbm_to_vmem [thread:$0]  %s0, 512, %s22, [#allocation3]
    $region5: #{medclip_mlp_classifier.1} parent=1 // pred_fallthru
      _
    // Predicated region
    $region6: #{medclip_mlp_classifier.1} parent=1 // pred_check
      _
    $region7: #{medclip_mlp_classifier.1} parent=1 // pred_check_branch
      %26 = sbr.rel (0) target = $region9
    $region8: #{medclip_mlp_classifier.1} parent=1 // pred_region
      %s28 = ssub.s32 512, 512
      %29 = vsyncadd [#allocation6], %s28
      %s31 = sshll.u32 [#allocation5], 4
      %s32 = int_to_ptr.vmem [resolvable:$true] %s31
      %34 = dma.hbm_to_vmem [thread:$0]  %s1, 512, %s32, [#allocation6]
    $region9: #{medclip_mlp_classifier.1} parent=1 // pred_fallthru
      _
    // Predicated region
    $region10: #{medclip_mlp_classifier.1} parent=1 // pred_check
      _
    $region11: #{medclip_mlp_classifier.1} parent=1 // pred_check_branch
      %36 = sbr.rel (0) target = $region13
    $region12: #{medclip_mlp_classifier.1} parent=1 // pred_region
      %s38 = ssub.s32 16384, 16384
      %39 = vsyncadd [#allocation6], %s38
      %s40 = sshll.u32 [#allocation7], 4
      %s41 = int_to_ptr.vmem [resolvable:$true] %s40
      %46 = dma.hbm_to_vmem [thread:$0]  %s2, 16384, %s41, [#allocation6], 256, 256, 16
    $region13: #{medclip_mlp_classifier.1} parent=1 // pred_fallthru
      _
    // Predicated region
    $region14: #{medclip_mlp_classifier.1} parent=1 // pred_check
      _
    $region15: #{medclip_mlp_classifier.1} parent=1 // pred_check_branch
      %48 = sbr.rel (0) target = $region17
    $region16: #{medclip_mlp_classifier.1} parent=1 // pred_region
      _
    $region17: #{medclip_mlp_classifier.1} parent=1 // pred_fallthru
      _
    // Predicated region
    $region18: #{medclip_mlp_classifier.1} parent=1 // pred_check
      _
    $region19: #{medclip_mlp_classifier.1} parent=1 // pred_check_branch
      %50 = sbr.rel (0) target = $region21
    $region20: #{medclip_mlp_classifier.1} parent=1 // pred_region
      %s52 = ssub.s32 4096, 4096
      %53 = vsyncadd [#allocation9], %s52
      %s54 = sshll.u32 [#allocation8], 4
      %s55 = int_to_ptr.vmem [resolvable:$true] %s54
      %60 = dma.hbm_to_vmem [thread:$0]  %s4, 4096, %s55, [#allocation9], 64, 64, 4
    $region21: #{medclip_mlp_classifier.1} parent=1 // pred_fallthru
      _
    // Predicated region
    $region22: #{medclip_mlp_classifier.1} parent=1 // pred_check
      _
    $region23: #{medclip_mlp_classifier.1} parent=1 // pred_check_branch
      %62 = sbr.rel (0) target = $region25
    $region24: #{medclip_mlp_classifier.1} parent=1 // pred_region
      _
    $region25: #{medclip_mlp_classifier.1} parent=1 // pred_fallthru
      _
    // Predicated region
    $region26: #{medclip_mlp_classifier.1} parent=1 // pred_check
      _
    $region27: #{medclip_mlp_classifier.1} parent=1 // pred_check_branch
      %64 = sbr.rel (0) target = $region29
    $region28: #{medclip_mlp_classifier.1} parent=1 // pred_region
      %65 = dma.done [#allocation3], 512
    $region29: #{medclip_mlp_classifier.1} parent=1 // pred_fallthru
      _
    // Predicated region
    $region30: #{medclip_mlp_classifier.1} parent=1 // pred_check
      _
    $region31: #{medclip_mlp_classifier.1} parent=1 // pred_check_branch
      %67 = sbr.rel (0) target = $region33
    $region32: #{medclip_mlp_classifier.1} parent=1 // pred_region
      %68 = dma.done [#allocation6], 512
    $region33: #{medclip_mlp_classifier.1} parent=1 // pred_fallthru
      _
    // Predicated region
    $region34: #{medclip_mlp_classifier.1} parent=1 // pred_check
      _
    $region35: #{medclip_mlp_classifier.1} parent=1 // pred_check_branch
      %70 = sbr.rel (0) target = $region37
    $region36: #{medclip_mlp_classifier.1} parent=1 // pred_region
      %71 = dma.done [#allocation6], 16384
    $region37: #{medclip_mlp_classifier.1} parent=1 // pred_fallthru
      _
    // Predicated region
    $region38: #{medclip_mlp_classifier.1} parent=1 // pred_check
      _
    $region39: #{medclip_mlp_classifier.1} parent=1 // pred_check_branch
      %73 = sbr.rel (0) target = $region41
    $region40: #{medclip_mlp_classifier.1} parent=1 // pred_region
      %74 = dma.done [#allocation9], 4096
    $region41: #{medclip_mlp_classifier.1} parent=1 // pred_fallthru
      _
    %v75 = vld [vmem:[#allocation2] sm:$0xff]
    %v76 = vld [vmem:[#allocation2 + $0x8] sm:$0xff]
    %v77 = vld [vmem:[#allocation2 + $0x10] sm:$0xff]
    %v78 = vld [vmem:[#allocation2 + $0x18] sm:$0xff]
    %v79 = vld [vmem:[#allocation5] sm:$0xff]
    %v80 = vld [vmem:[#allocation5 + $0x8] sm:$0xff]
    %v81 = vld [vmem:[#allocation5 + $0x10] sm:$0xff]
    %v82 = vld [vmem:[#allocation5 + $0x18] sm:$0xff]
    %v83 = vadd.f32 %v75, %v79
    %v84 = vadd.f32 %v76, %v80
    %v85 = vadd.f32 %v77, %v81
    %v86 = vadd.f32 %v78, %v82
    %v87 = vpack.c.bf16 %v83, %v83
    %v88 = vpack.c.bf16 %v84, %v84
    %v89 = vpack.c.bf16 %v85, %v85
    %v90 = vpack.c.bf16 %v86, %v86
    %v91 = vld [vmem:[#allocation7] sm:$0xff]
    %v92 = vld [vmem:[#allocation7 + $0x8] sm:$0xff]
    %v93 = vld [vmem:[#allocation7 + $0x10] sm:$0xff]
    %v94 = vld [vmem:[#allocation7 + $0x18] sm:$0xff]
    %v95 = vld [vmem:[#allocation7 + $0x20] sm:$0xff]
    %v96 = vld [vmem:[#allocation7 + $0x28] sm:$0xff]
    %v97 = vld [vmem:[#allocation7 + $0x30] sm:$0xff]
    %v98 = vld [vmem:[#allocation7 + $0x38] sm:$0xff]
    %v99 = vld [vmem:[#allocation7 + $0x40] sm:$0xff]
    %v100 = vld [vmem:[#allocation7 + $0x48] sm:$0xff]
    %v101 = vld [vmem:[#allocation7 + $0x50] sm:$0xff]
    %v102 = vld [vmem:[#allocation7 + $0x58] sm:$0xff]
    %v103 = vld [vmem:[#allocation7 + $0x60] sm:$0xff]
    %v104 = vld [vmem:[#allocation7 + $0x68] sm:$0xff]
    %v105 = vld [vmem:[#allocation7 + $0x70] sm:$0xff]
    %v106 = vld [vmem:[#allocation7 + $0x78] sm:$0xff]
    %v107 = vld [vmem:[#allocation7 + $0x80] sm:$0xff]
    %v108 = vld [vmem:[#allocation7 + $0x88] sm:$0xff]
    %v109 = vld [vmem:[#allocation7 + $0x90] sm:$0xff]
    %v110 = vld [vmem:[#allocation7 + $0x98] sm:$0xff]
    %v111 = vld [vmem:[#allocation7 + $0xa0] sm:$0xff]
    %v112 = vld [vmem:[#allocation7 + $0xa8] sm:$0xff]
    %v113 = vld [vmem:[#allocation7 + $0xb0] sm:$0xff]
    %v114 = vld [vmem:[#allocation7 + $0xb8] sm:$0xff]
    %v115 = vld [vmem:[#allocation7 + $0xc0] sm:$0xff]
    %v116 = vld [vmem:[#allocation7 + $0xc8] sm:$0xff]
    %v117 = vld [vmem:[#allocation7 + $0xd0] sm:$0xff]
    %v118 = vld [vmem:[#allocation7 + $0xd8] sm:$0xff]
    %v119 = vld [vmem:[#allocation7 + $0xe0] sm:$0xff]
    %v120 = vld [vmem:[#allocation7 + $0xe8] sm:$0xff]
    %v121 = vld [vmem:[#allocation7 + $0xf0] sm:$0xff]
    %v122 = vld [vmem:[#allocation7 + $0xf8] sm:$0xff]
    %v123 = vld [vmem:[#allocation7 + $0x100] sm:$0xff]
    %v124 = vld [vmem:[#allocation7 + $0x108] sm:$0xff]
    %v125 = vld [vmem:[#allocation7 + $0x110] sm:$0xff]
    %v126 = vld [vmem:[#allocation7 + $0x118] sm:$0xff]
    %v127 = vld [vmem:[#allocation7 + $0x120] sm:$0xff]
    %v128 = vld [vmem:[#allocation7 + $0x128] sm:$0xff]
    %v129 = vld [vmem:[#allocation7 + $0x130] sm:$0xff]
    %v130 = vld [vmem:[#allocation7 + $0x138] sm:$0xff]
    %v131 = vld [vmem:[#allocation7 + $0x140] sm:$0xff]
    %v132 = vld [vmem:[#allocation7 + $0x148] sm:$0xff]
    %v133 = vld [vmem:[#allocation7 + $0x150] sm:$0xff]
    %v134 = vld [vmem:[#allocation7 + $0x158] sm:$0xff]
    %v135 = vld [vmem:[#allocation7 + $0x160] sm:$0xff]
    %v136 = vld [vmem:[#allocation7 + $0x168] sm:$0xff]
    %v137 = vld [vmem:[#allocation7 + $0x170] sm:$0xff]
    %v138 = vld [vmem:[#allocation7 + $0x178] sm:$0xff]
    %v139 = vld [vmem:[#allocation7 + $0x180] sm:$0xff]
    %v140 = vld [vmem:[#allocation7 + $0x188] sm:$0xff]
    %v141 = vld [vmem:[#allocation7 + $0x190] sm:$0xff]
    %v142 = vld [vmem:[#allocation7 + $0x198] sm:$0xff]
    %v143 = vld [vmem:[#allocation7 + $0x1a0] sm:$0xff]
    %v144 = vld [vmem:[#allocation7 + $0x1a8] sm:$0xff]
    %v145 = vld [vmem:[#allocation7 + $0x1b0] sm:$0xff]
    %v146 = vld [vmem:[#allocation7 + $0x1b8] sm:$0xff]
    %v147 = vld [vmem:[#allocation7 + $0x1c0] sm:$0xff]
    %v148 = vld [vmem:[#allocation7 + $0x1c8] sm:$0xff]
    %v149 = vld [vmem:[#allocation7 + $0x1d0] sm:$0xff]
    %v150 = vld [vmem:[#allocation7 + $0x1d8] sm:$0xff]
    %v151 = vld [vmem:[#allocation7 + $0x1e0] sm:$0xff]
    %v152 = vld [vmem:[#allocation7 + $0x1e8] sm:$0xff]
    %v153 = vld [vmem:[#allocation7 + $0x1f0] sm:$0xff]
    %v154 = vld [vmem:[#allocation7 + $0x1f8] sm:$0xff]
    %v155 = vld [vmem:[#allocation7 + $0x200] sm:$0xff]
    %v156 = vld [vmem:[#allocation7 + $0x208] sm:$0xff]
    %v157 = vld [vmem:[#allocation7 + $0x210] sm:$0xff]
    %v158 = vld [vmem:[#allocation7 + $0x218] sm:$0xff]
    %v159 = vld [vmem:[#allocation7 + $0x220] sm:$0xff]
    %v160 = vld [vmem:[#allocation7 + $0x228] sm:$0xff]
    %v161 = vld [vmem:[#allocation7 + $0x230] sm:$0xff]
    %v162 = vld [vmem:[#allocation7 + $0x238] sm:$0xff]
    %v163 = vld [vmem:[#allocation7 + $0x240] sm:$0xff]
    %v164 = vld [vmem:[#allocation7 + $0x248] sm:$0xff]
    %v165 = vld [vmem:[#allocation7 + $0x250] sm:$0xff]
    %v166 = vld [vmem:[#allocation7 + $0x258] sm:$0xff]
    %v167 = vld [vmem:[#allocation7 + $0x260] sm:$0xff]
    %v168 = vld [vmem:[#allocation7 + $0x268] sm:$0xff]
    %v169 = vld [vmem:[#allocation7 + $0x270] sm:$0xff]
    %v170 = vld [vmem:[#allocation7 + $0x278] sm:$0xff]
    %v171 = vld [vmem:[#allocation7 + $0x280] sm:$0xff]
    %v172 = vld [vmem:[#allocation7 + $0x288] sm:$0xff]
    %v173 = vld [vmem:[#allocation7 + $0x290] sm:$0xff]
    %v174 = vld [vmem:[#allocation7 + $0x298] sm:$0xff]
    %v175 = vld [vmem:[#allocation7 + $0x2a0] sm:$0xff]
    %v176 = vld [vmem:[#allocation7 + $0x2a8] sm:$0xff]
    %v177 = vld [vmem:[#allocation7 + $0x2b0] sm:$0xff]
    %v178 = vld [vmem:[#allocation7 + $0x2b8] sm:$0xff]
    %v179 = vld [vmem:[#allocation7 + $0x2c0] sm:$0xff]
    %v180 = vld [vmem:[#allocation7 + $0x2c8] sm:$0xff]
    %v181 = vld [vmem:[#allocation7 + $0x2d0] sm:$0xff]
    %v182 = vld [vmem:[#allocation7 + $0x2d8] sm:$0xff]
    %v183 = vld [vmem:[#allocation7 + $0x2e0] sm:$0xff]
    %v184 = vld [vmem:[#allocation7 + $0x2e8] sm:$0xff]
    %v185 = vld [vmem:[#allocation7 + $0x2f0] sm:$0xff]
    %v186 = vld [vmem:[#allocation7 + $0x2f8] sm:$0xff]
    %v187 = vld [vmem:[#allocation7 + $0x300] sm:$0xff]
    %v188 = vld [vmem:[#allocation7 + $0x308] sm:$0xff]
    %v189 = vld [vmem:[#allocation7 + $0x310] sm:$0xff]
    %v190 = vld [vmem:[#allocation7 + $0x318] sm:$0xff]
    %v191 = vld [vmem:[#allocation7 + $0x320] sm:$0xff]
    %v192 = vld [vmem:[#allocation7 + $0x328] sm:$0xff]
    %v193 = vld [vmem:[#allocation7 + $0x330] sm:$0xff]
    %v194 = vld [vmem:[#allocation7 + $0x338] sm:$0xff]
    %v195 = vld [vmem:[#allocation7 + $0x340] sm:$0xff]
    %v196 = vld [vmem:[#allocation7 + $0x348] sm:$0xff]
    %v197 = vld [vmem:[#allocation7 + $0x350] sm:$0xff]
    %v198 = vld [vmem:[#allocation7 + $0x358] sm:$0xff]
    %v199 = vld [vmem:[#allocation7 + $0x360] sm:$0xff]
    %v200 = vld [vmem:[#allocation7 + $0x368] sm:$0xff]
    %v201 = vld [vmem:[#allocation7 + $0x370] sm:$0xff]
    %v202 = vld [vmem:[#allocation7 + $0x378] sm:$0xff]
    %v203 = vld [vmem:[#allocation7 + $0x380] sm:$0xff]
    %v204 = vld [vmem:[#allocation7 + $0x388] sm:$0xff]
    %v205 = vld [vmem:[#allocation7 + $0x390] sm:$0xff]
    %v206 = vld [vmem:[#allocation7 + $0x398] sm:$0xff]
    %v207 = vld [vmem:[#allocation7 + $0x3a0] sm:$0xff]
    %v208 = vld [vmem:[#allocation7 + $0x3a8] sm:$0xff]
    %v209 = vld [vmem:[#allocation7 + $0x3b0] sm:$0xff]
    %v210 = vld [vmem:[#allocation7 + $0x3b8] sm:$0xff]
    %v211 = vld [vmem:[#allocation7 + $0x3c0] sm:$0xff]
    %v212 = vld [vmem:[#allocation7 + $0x3c8] sm:$0xff]
    %v213 = vld [vmem:[#allocation7 + $0x3d0] sm:$0xff]
    %v214 = vld [vmem:[#allocation7 + $0x3d8] sm:$0xff]
    %v215 = vld [vmem:[#allocation7 + $0x3e0] sm:$0xff]
    %v216 = vld [vmem:[#allocation7 + $0x3e8] sm:$0xff]
    %v217 = vld [vmem:[#allocation7 + $0x3f0] sm:$0xff]
    %v218 = vld [vmem:[#allocation7 + $0x3f8] sm:$0xff]
    %v219 = vld [vmem:[%s3] sm:$0xf]
    %v221 = vlaneseq
    %v222 = vshrl.u32 %v221, 7
    %v223 = vsub.s32 0, %v222
    %v224 = vrot.slane %v219, %v223
    %v225 = vlaneseq
    %v226 = vshrl.u32 %v225, 7
    %v227 = vsub.s32 1, %v226
    %v228 = vrot.slane %v219, %v227
    %v229 = vlaneseq
    %v230 = vshrl.u32 %v229, 7
    %v231 = vsub.s32 2, %v230
    %v232 = vrot.slane %v219, %v231
    %v233 = vlaneseq
    %v234 = vshrl.u32 %v233, 7
    %v235 = vsub.s32 3, %v234
    %v236 = vrot.slane %v219, %v235
    %v369 = vunpack.c.l.b16 %v91
    %v370 = vunpack.c.h.b16 %v91
    %v371 = vunpack.c.l.b16 %v92
    %v372 = vunpack.c.h.b16 %v92
    %v373 = vunpack.c.l.b16 %v93
    %v374 = vunpack.c.h.b16 %v93
    %v375 = vunpack.c.l.b16 %v94
    %v376 = vunpack.c.h.b16 %v94
    %v377 = vunpack.c.l.b16 %v95
    %v378 = vunpack.c.h.b16 %v95
    %v379 = vunpack.c.l.b16 %v96
    %v380 = vunpack.c.h.b16 %v96
    %v381 = vunpack.c.l.b16 %v97
    %v382 = vunpack.c.h.b16 %v97
    %v383 = vunpack.c.l.b16 %v98
    %v384 = vunpack.c.h.b16 %v98
    %v385 = vunpack.c.l.b16 %v99
    %v386 = vunpack.c.h.b16 %v99
    %v387 = vunpack.c.l.b16 %v100
    %v388 = vunpack.c.h.b16 %v100
    %v389 = vunpack.c.l.b16 %v101
    %v390 = vunpack.c.h.b16 %v101
    %v391 = vunpack.c.l.b16 %v102
    %v392 = vunpack.c.h.b16 %v102
    %v393 = vunpack.c.l.b16 %v103
    %v394 = vunpack.c.h.b16 %v103
    %v395 = vunpack.c.l.b16 %v104
    %v396 = vunpack.c.h.b16 %v104
    %v397 = vunpack.c.l.b16 %v105
    %v398 = vunpack.c.h.b16 %v105
    %v399 = vunpack.c.l.b16 %v106
    %v400 = vunpack.c.h.b16 %v106
    %v401 = vunpack.c.l.b16 %v107
    %v402 = vunpack.c.h.b16 %v107
    %v403 = vunpack.c.l.b16 %v108
    %v404 = vunpack.c.h.b16 %v108
    %v405 = vunpack.c.l.b16 %v109
    %v406 = vunpack.c.h.b16 %v109
    %v407 = vunpack.c.l.b16 %v110
    %v408 = vunpack.c.h.b16 %v110
    %v409 = vunpack.c.l.b16 %v111
    %v410 = vunpack.c.h.b16 %v111
    %v411 = vunpack.c.l.b16 %v112
    %v412 = vunpack.c.h.b16 %v112
    %v413 = vunpack.c.l.b16 %v113
    %v414 = vunpack.c.h.b16 %v113
    %v415 = vunpack.c.l.b16 %v114
    %v416 = vunpack.c.h.b16 %v114
    %v417 = vunpack.c.l.b16 %v115
    %v418 = vunpack.c.h.b16 %v115
    %v419 = vunpack.c.l.b16 %v116
    %v420 = vunpack.c.h.b16 %v116
    %v421 = vunpack.c.l.b16 %v117
    %v422 = vunpack.c.h.b16 %v117
    %v423 = vunpack.c.l.b16 %v118
    %v424 = vunpack.c.h.b16 %v118
    %v425 = vunpack.c.l.b16 %v119
    %v426 = vunpack.c.h.b16 %v119
    %v427 = vunpack.c.l.b16 %v120
    %v428 = vunpack.c.h.b16 %v120
    %v429 = vunpack.c.l.b16 %v121
    %v430 = vunpack.c.h.b16 %v121
    %v431 = vunpack.c.l.b16 %v122
    %v432 = vunpack.c.h.b16 %v122
    %v433 = vunpack.c.l.b16 %v123
    %v434 = vunpack.c.h.b16 %v123
    %v435 = vunpack.c.l.b16 %v124
    %v436 = vunpack.c.h.b16 %v124
    %v437 = vunpack.c.l.b16 %v125
    %v438 = vunpack.c.h.b16 %v125
    %v439 = vunpack.c.l.b16 %v126
    %v440 = vunpack.c.h.b16 %v126
    %v441 = vunpack.c.l.b16 %v127
    %v442 = vunpack.c.h.b16 %v127
    %v443 = vunpack.c.l.b16 %v128
    %v444 = vunpack.c.h.b16 %v128
    %v445 = vunpack.c.l.b16 %v129
    %v446 = vunpack.c.h.b16 %v129
    %v447 = vunpack.c.l.b16 %v130
    %v448 = vunpack.c.h.b16 %v130
    %v449 = vunpack.c.l.b16 %v131
    %v450 = vunpack.c.h.b16 %v131
    %v451 = vunpack.c.l.b16 %v132
    %v452 = vunpack.c.h.b16 %v132
    %v453 = vunpack.c.l.b16 %v133
    %v454 = vunpack.c.h.b16 %v133
    %v455 = vunpack.c.l.b16 %v134
    %v456 = vunpack.c.h.b16 %v134
    %v457 = vunpack.c.l.b16 %v135
    %v458 = vunpack.c.h.b16 %v135
    %v459 = vunpack.c.l.b16 %v136
    %v460 = vunpack.c.h.b16 %v136
    %v461 = vunpack.c.l.b16 %v137
    %v462 = vunpack.c.h.b16 %v137
    %v463 = vunpack.c.l.b16 %v138
    %v464 = vunpack.c.h.b16 %v138
    %v465 = vunpack.c.l.b16 %v139
    %v466 = vunpack.c.h.b16 %v139
    %v467 = vunpack.c.l.b16 %v140
    %v468 = vunpack.c.h.b16 %v140
    %v469 = vunpack.c.l.b16 %v141
    %v470 = vunpack.c.h.b16 %v141
    %v471 = vunpack.c.l.b16 %v142
    %v472 = vunpack.c.h.b16 %v142
    %v473 = vunpack.c.l.b16 %v143
    %v474 = vunpack.c.h.b16 %v143
    %v475 = vunpack.c.l.b16 %v144
    %v476 = vunpack.c.h.b16 %v144
    %v477 = vunpack.c.l.b16 %v145
    %v478 = vunpack.c.h.b16 %v145
    %v479 = vunpack.c.l.b16 %v146
    %v480 = vunpack.c.h.b16 %v146
    %v481 = vunpack.c.l.b16 %v147
    %v482 = vunpack.c.h.b16 %v147
    %v483 = vunpack.c.l.b16 %v148
    %v484 = vunpack.c.h.b16 %v148
    %v485 = vunpack.c.l.b16 %v149
    %v486 = vunpack.c.h.b16 %v149
    %v487 = vunpack.c.l.b16 %v150
    %v488 = vunpack.c.h.b16 %v150
    %v489 = vunpack.c.l.b16 %v151
    %v490 = vunpack.c.h.b16 %v151
    %v491 = vunpack.c.l.b16 %v152
    %v492 = vunpack.c.h.b16 %v152
    %v493 = vunpack.c.l.b16 %v153
    %v494 = vunpack.c.h.b16 %v153
    %v495 = vunpack.c.l.b16 %v154
    %v496 = vunpack.c.h.b16 %v154
    %v497 = vunpack.c.l.b16 %v155
    %v498 = vunpack.c.h.b16 %v155
    %v499 = vunpack.c.l.b16 %v156
    %v500 = vunpack.c.h.b16 %v156
    %v501 = vunpack.c.l.b16 %v157
    %v502 = vunpack.c.h.b16 %v157
    %v503 = vunpack.c.l.b16 %v158
    %v504 = vunpack.c.h.b16 %v158
    %v505 = vunpack.c.l.b16 %v159
    %v506 = vunpack.c.h.b16 %v159
    %v507 = vunpack.c.l.b16 %v160
    %v508 = vunpack.c.h.b16 %v160
    %v509 = vunpack.c.l.b16 %v161
    %v510 = vunpack.c.h.b16 %v161
    %v511 = vunpack.c.l.b16 %v162
    %v512 = vunpack.c.h.b16 %v162
    %v513 = vunpack.c.l.b16 %v163
    %v514 = vunpack.c.h.b16 %v163
    %v515 = vunpack.c.l.b16 %v164
    %v516 = vunpack.c.h.b16 %v164
    %v517 = vunpack.c.l.b16 %v165
    %v518 = vunpack.c.h.b16 %v165
    %v519 = vunpack.c.l.b16 %v166
    %v520 = vunpack.c.h.b16 %v166
    %v521 = vunpack.c.l.b16 %v167
    %v522 = vunpack.c.h.b16 %v167
    %v523 = vunpack.c.l.b16 %v168
    %v524 = vunpack.c.h.b16 %v168
    %v525 = vunpack.c.l.b16 %v169
    %v526 = vunpack.c.h.b16 %v169
    %v527 = vunpack.c.l.b16 %v170
    %v528 = vunpack.c.h.b16 %v170
    %v529 = vunpack.c.l.b16 %v171
    %v530 = vunpack.c.h.b16 %v171
    %v531 = vunpack.c.l.b16 %v172
    %v532 = vunpack.c.h.b16 %v172
    %v533 = vunpack.c.l.b16 %v173
    %v534 = vunpack.c.h.b16 %v173
    %v535 = vunpack.c.l.b16 %v174
    %v536 = vunpack.c.h.b16 %v174
    %v537 = vunpack.c.l.b16 %v175
    %v538 = vunpack.c.h.b16 %v175
    %v539 = vunpack.c.l.b16 %v176
    %v540 = vunpack.c.h.b16 %v176
    %v541 = vunpack.c.l.b16 %v177
    %v542 = vunpack.c.h.b16 %v177
    %v543 = vunpack.c.l.b16 %v178
    %v544 = vunpack.c.h.b16 %v178
    %v545 = vunpack.c.l.b16 %v179
    %v546 = vunpack.c.h.b16 %v179
    %v547 = vunpack.c.l.b16 %v180
    %v548 = vunpack.c.h.b16 %v180
    %v549 = vunpack.c.l.b16 %v181
    %v550 = vunpack.c.h.b16 %v181
    %v551 = vunpack.c.l.b16 %v182
    %v552 = vunpack.c.h.b16 %v182
    %v553 = vunpack.c.l.b16 %v183
    %v554 = vunpack.c.h.b16 %v183
    %v555 = vunpack.c.l.b16 %v184
    %v556 = vunpack.c.h.b16 %v184
    %v557 = vunpack.c.l.b16 %v185
    %v558 = vunpack.c.h.b16 %v185
    %v559 = vunpack.c.l.b16 %v186
    %v560 = vunpack.c.h.b16 %v186
    %v561 = vunpack.c.l.b16 %v187
    %v562 = vunpack.c.h.b16 %v187
    %v563 = vunpack.c.l.b16 %v188
    %v564 = vunpack.c.h.b16 %v188
    %v565 = vunpack.c.l.b16 %v189
    %v566 = vunpack.c.h.b16 %v189
    %v567 = vunpack.c.l.b16 %v190
    %v568 = vunpack.c.h.b16 %v190
    %v569 = vunpack.c.l.b16 %v191
    %v570 = vunpack.c.h.b16 %v191
    %v571 = vunpack.c.l.b16 %v192
    %v572 = vunpack.c.h.b16 %v192
    %v573 = vunpack.c.l.b16 %v193
    %v574 = vunpack.c.h.b16 %v193
    %v575 = vunpack.c.l.b16 %v194
    %v576 = vunpack.c.h.b16 %v194
    %v577 = vunpack.c.l.b16 %v195
    %v578 = vunpack.c.h.b16 %v195
    %v579 = vunpack.c.l.b16 %v196
    %v580 = vunpack.c.h.b16 %v196
    %v581 = vunpack.c.l.b16 %v197
    %v582 = vunpack.c.h.b16 %v197
    %v583 = vunpack.c.l.b16 %v198
    %v584 = vunpack.c.h.b16 %v198
    %v585 = vunpack.c.l.b16 %v199
    %v586 = vunpack.c.h.b16 %v199
    %v587 = vunpack.c.l.b16 %v200
    %v588 = vunpack.c.h.b16 %v200
    %v589 = vunpack.c.l.b16 %v201
    %v590 = vunpack.c.h.b16 %v201
    %v591 = vunpack.c.l.b16 %v202
    %v592 = vunpack.c.h.b16 %v202
    %v593 = vunpack.c.l.b16 %v203
    %v594 = vunpack.c.h.b16 %v203
    %v595 = vunpack.c.l.b16 %v204
    %v596 = vunpack.c.h.b16 %v204
    %v597 = vunpack.c.l.b16 %v205
    %v598 = vunpack.c.h.b16 %v205
    %v599 = vunpack.c.l.b16 %v206
    %v600 = vunpack.c.h.b16 %v206
    %v601 = vunpack.c.l.b16 %v207
    %v602 = vunpack.c.h.b16 %v207
    %v603 = vunpack.c.l.b16 %v208
    %v604 = vunpack.c.h.b16 %v208
    %v605 = vunpack.c.l.b16 %v209
    %v606 = vunpack.c.h.b16 %v209
    %v607 = vunpack.c.l.b16 %v210
    %v608 = vunpack.c.h.b16 %v210
    %v609 = vunpack.c.l.b16 %v211
    %v610 = vunpack.c.h.b16 %v211
    %v611 = vunpack.c.l.b16 %v212
    %v612 = vunpack.c.h.b16 %v212
    %v613 = vunpack.c.l.b16 %v213
    %v614 = vunpack.c.h.b16 %v213
    %v615 = vunpack.c.l.b16 %v214
    %v616 = vunpack.c.h.b16 %v214
    %v617 = vunpack.c.l.b16 %v215
    %v618 = vunpack.c.h.b16 %v215
    %v619 = vunpack.c.l.b16 %v216
    %v620 = vunpack.c.h.b16 %v216
    %v621 = vunpack.c.l.b16 %v217
    %v622 = vunpack.c.h.b16 %v217
    %v623 = vunpack.c.l.b16 %v218
    %v624 = vunpack.c.h.b16 %v218
    %v625 = vpack.c.b16 %v373, %v369
    %v626 = vpack.c.b16 %v374, %v370
    %v627 = vpack.c.b16 %v375, %v371
    %v628 = vpack.c.b16 %v376, %v372
    %v629 = vpack.c.b16 %v381, %v377
    %v630 = vpack.c.b16 %v382, %v378
    %v631 = vpack.c.b16 %v383, %v379
    %v632 = vpack.c.b16 %v384, %v380
    %v633 = vpack.c.b16 %v389, %v385
    %v634 = vpack.c.b16 %v390, %v386
    %v635 = vpack.c.b16 %v391, %v387
    %v636 = vpack.c.b16 %v392, %v388
    %v637 = vpack.c.b16 %v397, %v393
    %v638 = vpack.c.b16 %v398, %v394
    %v639 = vpack.c.b16 %v399, %v395
    %v640 = vpack.c.b16 %v400, %v396
    %v641 = vpack.c.b16 %v405, %v401
    %v642 = vpack.c.b16 %v406, %v402
    %v643 = vpack.c.b16 %v407, %v403
    %v644 = vpack.c.b16 %v408, %v404
    %v645 = vpack.c.b16 %v413, %v409
    %v646 = vpack.c.b16 %v414, %v410
    %v647 = vpack.c.b16 %v415, %v411
    %v648 = vpack.c.b16 %v416, %v412
    %v649 = vpack.c.b16 %v421, %v417
    %v650 = vpack.c.b16 %v422, %v418
    %v651 = vpack.c.b16 %v423, %v419
    %v652 = vpack.c.b16 %v424, %v420
    %v653 = vpack.c.b16 %v429, %v425
    %v654 = vpack.c.b16 %v430, %v426
    %v655 = vpack.c.b16 %v431, %v427
    %v656 = vpack.c.b16 %v432, %v428
    %v657 = vpack.c.b16 %v437, %v433
    %v658 = vpack.c.b16 %v438, %v434
    %v659 = vpack.c.b16 %v439, %v435
    %v660 = vpack.c.b16 %v440, %v436
    %v661 = vpack.c.b16 %v445, %v441
    %v662 = vpack.c.b16 %v446, %v442
    %v663 = vpack.c.b16 %v447, %v443
    %v664 = vpack.c.b16 %v448, %v444
    %v665 = vpack.c.b16 %v453, %v449
    %v666 = vpack.c.b16 %v454, %v450
    %v667 = vpack.c.b16 %v455, %v451
    %v668 = vpack.c.b16 %v456, %v452
    %v669 = vpack.c.b16 %v461, %v457
    %v670 = vpack.c.b16 %v462, %v458
    %v671 = vpack.c.b16 %v463, %v459
    %v672 = vpack.c.b16 %v464, %v460
    %v673 = vpack.c.b16 %v469, %v465
    %v674 = vpack.c.b16 %v470, %v466
    %v675 = vpack.c.b16 %v471, %v467
    %v676 = vpack.c.b16 %v472, %v468
    %v677 = vpack.c.b16 %v477, %v473
    %v678 = vpack.c.b16 %v478, %v474
    %v679 = vpack.c.b16 %v479, %v475
    %v680 = vpack.c.b16 %v480, %v476
    %v681 = vpack.c.b16 %v485, %v481
    %v682 = vpack.c.b16 %v486, %v482
    %v683 = vpack.c.b16 %v487, %v483
    %v684 = vpack.c.b16 %v488, %v484
    %v685 = vpack.c.b16 %v493, %v489
    %v686 = vpack.c.b16 %v494, %v490
    %v687 = vpack.c.b16 %v495, %v491
    %v688 = vpack.c.b16 %v496, %v492
    %v689 = vpack.c.b16 %v501, %v497
    %v690 = vpack.c.b16 %v502, %v498
    %v691 = vpack.c.b16 %v503, %v499
    %v692 = vpack.c.b16 %v504, %v500
    %v693 = vpack.c.b16 %v509, %v505
    %v694 = vpack.c.b16 %v510, %v506
    %v695 = vpack.c.b16 %v511, %v507
    %v696 = vpack.c.b16 %v512, %v508
    %v697 = vpack.c.b16 %v517, %v513
    %v698 = vpack.c.b16 %v518, %v514
    %v699 = vpack.c.b16 %v519, %v515
    %v700 = vpack.c.b16 %v520, %v516
    %v701 = vpack.c.b16 %v525, %v521
    %v702 = vpack.c.b16 %v526, %v522
    %v703 = vpack.c.b16 %v527, %v523
    %v704 = vpack.c.b16 %v528, %v524
    %v705 = vpack.c.b16 %v533, %v529
    %v706 = vpack.c.b16 %v534, %v530
    %v707 = vpack.c.b16 %v535, %v531
    %v708 = vpack.c.b16 %v536, %v532
    %v709 = vpack.c.b16 %v541, %v537
    %v710 = vpack.c.b16 %v542, %v538
    %v711 = vpack.c.b16 %v543, %v539
    %v712 = vpack.c.b16 %v544, %v540
    %v713 = vpack.c.b16 %v549, %v545
    %v714 = vpack.c.b16 %v550, %v546
    %v715 = vpack.c.b16 %v551, %v547
    %v716 = vpack.c.b16 %v552, %v548
    %v717 = vpack.c.b16 %v557, %v553
    %v718 = vpack.c.b16 %v558, %v554
    %v719 = vpack.c.b16 %v559, %v555
    %v720 = vpack.c.b16 %v560, %v556
    %v721 = vpack.c.b16 %v565, %v561
    %v722 = vpack.c.b16 %v566, %v562
    %v723 = vpack.c.b16 %v567, %v563
    %v724 = vpack.c.b16 %v568, %v564
    %v725 = vpack.c.b16 %v573, %v569
    %v726 = vpack.c.b16 %v574, %v570
    %v727 = vpack.c.b16 %v575, %v571
    %v728 = vpack.c.b16 %v576, %v572
    %v729 = vpack.c.b16 %v581, %v577
    %v730 = vpack.c.b16 %v582, %v578
    %v731 = vpack.c.b16 %v583, %v579
    %v732 = vpack.c.b16 %v584, %v580
    %v733 = vpack.c.b16 %v589, %v585
    %v734 = vpack.c.b16 %v590, %v586
    %v735 = vpack.c.b16 %v591, %v587
    %v736 = vpack.c.b16 %v592, %v588
    %v737 = vpack.c.b16 %v597, %v593
    %v738 = vpack.c.b16 %v598, %v594
    %v739 = vpack.c.b16 %v599, %v595
    %v740 = vpack.c.b16 %v600, %v596
    %v741 = vpack.c.b16 %v605, %v601
    %v742 = vpack.c.b16 %v606, %v602
    %v743 = vpack.c.b16 %v607, %v603
    %v744 = vpack.c.b16 %v608, %v604
    %v745 = vpack.c.b16 %v613, %v609
    %v746 = vpack.c.b16 %v614, %v610
    %v747 = vpack.c.b16 %v615, %v611
    %v748 = vpack.c.b16 %v616, %v612
    %v749 = vpack.c.b16 %v621, %v617
    %v750 = vpack.c.b16 %v622, %v618
    %v751 = vpack.c.b16 %v623, %v619
    %v752 = vpack.c.b16 %v624, %v620
    %881 = vmatprep.subr.bf16.mxu0 %v654
    %882 = vmatpush1.bf16.msra.mxu0 %v653
    %883 = vmatprep.subr.bf16.mxu0 %v650
    %884 = vmatpush1.bf16.msra.mxu0 %v649
    %885 = vmatprep.subr.bf16.mxu0 %v646
    %886 = vmatpush1.bf16.msra.mxu0 %v645
    %887 = vmatprep.subr.bf16.mxu0 %v642
    %888 = vmatpush1.bf16.msra.mxu0 %v641
    %889 = vmatprep.subr.bf16.mxu0 %v638
    %890 = vmatpush1.bf16.msra.mxu0 %v637
    %891 = vmatprep.subr.bf16.mxu0 %v634
    %892 = vmatpush1.bf16.msra.mxu0 %v633
    %893 = vmatprep.subr.bf16.mxu0 %v630
    %894 = vmatpush1.bf16.msra.mxu0 %v629
    %895 = vmatprep.subr.bf16.mxu0 %v626
    %896 = vmatpush1.bf16.msra.mxu0 %v625
    %897 = vmatprep.subr.bf16.mxu0 %v686
    %898 = vmatpush2.bf16.msra.mxu0 %v685
    %899 = vmatprep.subr.bf16.mxu0 %v682
    %900 = vmatpush2.bf16.msra.mxu0 %v681
    %901 = vmatprep.subr.bf16.mxu0 %v678
    %902 = vmatpush2.bf16.msra.mxu0 %v677
    %903 = vmatprep.subr.bf16.mxu0 %v674
    %904 = vmatpush2.bf16.msra.mxu0 %v673
    %905 = vmatprep.subr.bf16.mxu0 %v670
    %906 = vmatpush2.bf16.msra.mxu0 %v669
    %907 = vmatprep.subr.bf16.mxu0 %v666
    %908 = vmatpush2.bf16.msra.mxu0 %v665
    %909 = vmatprep.subr.bf16.mxu0 %v662
    %910 = vmatpush2.bf16.msra.mxu0 %v661
    %911 = vmatprep.subr.bf16.mxu0 %v658
    %912 = vmatpush2.bf16.msra.mxu0 %v657
    %913 = vmatprep.mubr.bf16.mxu0 %v88
    %914 = vmatmul.mubr.bf16.gmra.mxu0 %v87
    %v915 = vpop.f32.mrf.mxu0
    %v916 = vadd.f32 %v224, %v915
    %v917 = vpop.f32.mrf.mxu0
    %v918 = vadd.f32 %v228, %v917
    %v919 = vpop.f32.mrf.mxu0
    %v920 = vpop.f32.mrf.mxu0
    %921 = vdwg.mxu0
    %922 = vmatprep.subr.bf16.mxu0 %v718
    %923 = vmatpush1.bf16.msra.mxu0 %v717
    %924 = vmatprep.subr.bf16.mxu0 %v714
    %925 = vmatpush1.bf16.msra.mxu0 %v713
    %926 = vmatprep.subr.bf16.mxu0 %v710
    %927 = vmatpush1.bf16.msra.mxu0 %v709
    %928 = vmatprep.subr.bf16.mxu0 %v706
    %929 = vmatpush1.bf16.msra.mxu0 %v705
    %930 = vmatprep.subr.bf16.mxu0 %v702
    %931 = vmatpush1.bf16.msra.mxu0 %v701
    %932 = vmatprep.subr.bf16.mxu0 %v698
    %933 = vmatpush1.bf16.msra.mxu0 %v697
    %934 = vmatprep.subr.bf16.mxu0 %v694
    %935 = vmatpush1.bf16.msra.mxu0 %v693
    %936 = vmatprep.subr.bf16.mxu0 %v690
    %937 = vmatpush1.bf16.msra.mxu0 %v689
    %938 = vmatprep.subr.bf16.mxu0 %v750
    %939 = vmatpush2.bf16.msra.mxu0 %v749
    %940 = vmatprep.subr.bf16.mxu0 %v746
    %941 = vmatpush2.bf16.msra.mxu0 %v745
    %942 = vmatprep.subr.bf16.mxu0 %v742
    %943 = vmatpush2.bf16.msra.mxu0 %v741
    %944 = vmatprep.subr.bf16.mxu0 %v738
    %945 = vmatpush2.bf16.msra.mxu0 %v737
    %946 = vmatprep.subr.bf16.mxu0 %v734
    %947 = vmatpush2.bf16.msra.mxu0 %v733
    %948 = vmatprep.subr.bf16.mxu0 %v730
    %949 = vmatpush2.bf16.msra.mxu0 %v729
    %950 = vmatprep.subr.bf16.mxu0 %v726
    %951 = vmatpush2.bf16.msra.mxu0 %v725
    %952 = vmatprep.subr.bf16.mxu0 %v722
    %953 = vmatpush2.bf16.msra.mxu0 %v721
    %954 = vmatprep.mubr.bf16.mxu0 %v90
    %955 = vmatmul.mubr.bf16.gmra.mxu0 %v89
    %v956 = vpop.f32.mrf.mxu0
    %v957 = vadd.f32 %v916, %v956
    %v958 = vpop.f32.mrf.mxu0
    %v959 = vadd.f32 %v918, %v958
    %v960 = vpop.f32.mrf.mxu0
    %v961 = vpop.f32.mrf.mxu0
    %962 = vdwg.mxu0
    %963 = vmatprep.subr.bf16.mxu0 %v656
    %964 = vmatpush1.bf16.msra.mxu0 %v655
    %965 = vmatprep.subr.bf16.mxu0 %v652
    %966 = vmatpush1.bf16.msra.mxu0 %v651
    %967 = vmatprep.subr.bf16.mxu0 %v648
    %968 = vmatpush1.bf16.msra.mxu0 %v647
    %969 = vmatprep.subr.bf16.mxu0 %v644
    %970 = vmatpush1.bf16.msra.mxu0 %v643
    %971 = vmatprep.subr.bf16.mxu0 %v640
    %972 = vmatpush1.bf16.msra.mxu0 %v639
    %973 = vmatprep.subr.bf16.mxu0 %v636
    %974 = vmatpush1.bf16.msra.mxu0 %v635
    %975 = vmatprep.subr.bf16.mxu0 %v632
    %976 = vmatpush1.bf16.msra.mxu0 %v631
    %977 = vmatprep.subr.bf16.mxu0 %v628
    %978 = vmatpush1.bf16.msra.mxu0 %v627
    %979 = vmatprep.subr.bf16.mxu0 %v688
    %980 = vmatpush2.bf16.msra.mxu0 %v687
    %981 = vmatprep.subr.bf16.mxu0 %v684
    %982 = vmatpush2.bf16.msra.mxu0 %v683
    %983 = vmatprep.subr.bf16.mxu0 %v680
    %984 = vmatpush2.bf16.msra.mxu0 %v679
    %985 = vmatprep.subr.bf16.mxu0 %v676
    %986 = vmatpush2.bf16.msra.mxu0 %v675
    %987 = vmatprep.subr.bf16.mxu0 %v672
    %988 = vmatpush2.bf16.msra.mxu0 %v671
    %989 = vmatprep.subr.bf16.mxu0 %v668
    %990 = vmatpush2.bf16.msra.mxu0 %v667
    %991 = vmatprep.subr.bf16.mxu0 %v664
    %992 = vmatpush2.bf16.msra.mxu0 %v663
    %993 = vmatprep.subr.bf16.mxu0 %v660
    %994 = vmatpush2.bf16.msra.mxu0 %v659
    %995 = vmatprep.mubr.bf16.mxu0 %v88
    %996 = vmatmul.mubr.bf16.gmra.mxu0 %v87
    %v997 = vpop.f32.mrf.mxu0
    %v998 = vadd.f32 %v232, %v997
    %v999 = vpop.f32.mrf.mxu0
    %v1000 = vadd.f32 %v236, %v999
    %v1001 = vpop.f32.mrf.mxu0
    %v1002 = vpop.f32.mrf.mxu0
    %1003 = vdwg.mxu0
    %1004 = vmatprep.subr.bf16.mxu0 %v720
    %1005 = vmatpush1.bf16.msra.mxu0 %v719
    %1006 = vmatprep.subr.bf16.mxu0 %v716
    %1007 = vmatpush1.bf16.msra.mxu0 %v715
    %1008 = vmatprep.subr.bf16.mxu0 %v712
    %1009 = vmatpush1.bf16.msra.mxu0 %v711
    %1010 = vmatprep.subr.bf16.mxu0 %v708
    %1011 = vmatpush1.bf16.msra.mxu0 %v707
    %1012 = vmatprep.subr.bf16.mxu0 %v704
    %1013 = vmatpush1.bf16.msra.mxu0 %v703
    %1014 = vmatprep.subr.bf16.mxu0 %v700
    %1015 = vmatpush1.bf16.msra.mxu0 %v699
    %1016 = vmatprep.subr.bf16.mxu0 %v696
    %1017 = vmatpush1.bf16.msra.mxu0 %v695
    %1018 = vmatprep.subr.bf16.mxu0 %v692
    %1019 = vmatpush1.bf16.msra.mxu0 %v691
    %1020 = vmatprep.subr.bf16.mxu0 %v752
    %1021 = vmatpush2.bf16.msra.mxu0 %v751
    %1022 = vmatprep.subr.bf16.mxu0 %v748
    %1023 = vmatpush2.bf16.msra.mxu0 %v747
    %1024 = vmatprep.subr.bf16.mxu0 %v744
    %1025 = vmatpush2.bf16.msra.mxu0 %v743
    %1026 = vmatprep.subr.bf16.mxu0 %v740
    %1027 = vmatpush2.bf16.msra.mxu0 %v739
    %1028 = vmatprep.subr.bf16.mxu0 %v736
    %1029 = vmatpush2.bf16.msra.mxu0 %v735
    %1030 = vmatprep.subr.bf16.mxu0 %v732
    %1031 = vmatpush2.bf16.msra.mxu0 %v731
    %1032 = vmatprep.subr.bf16.mxu0 %v728
    %1033 = vmatpush2.bf16.msra.mxu0 %v727
    %1034 = vmatprep.subr.bf16.mxu0 %v724
    %1035 = vmatpush2.bf16.msra.mxu0 %v723
    %1036 = vmatprep.mubr.bf16.mxu0 %v90
    %1037 = vmatmul.mubr.bf16.gmra.mxu0 %v89
    %v1038 = vpop.f32.mrf.mxu0
    %v1039 = vadd.f32 %v998, %v1038
    %v1040 = vpop.f32.mrf.mxu0
    %v1041 = vadd.f32 %v1000, %v1040
    %v1042 = vpop.f32.mrf.mxu0
    %v1043 = vpop.f32.mrf.mxu0
    %1044 = vdwg.mxu0
    %v1045 = vmax.f32 %v957, 0.0
    %v1046 = vmax.f32 %v959, 0.0
    %v1047 = vmax.f32 %v1039, 0.0
    %v1048 = vmax.f32 %v1041, 0.0
    %v1049 = vld [vmem:[#allocation8] sm:$0xf]
    %v1050 = vld [vmem:[#allocation8 + $0x4] sm:$0xf]
    %v1051 = vld [vmem:[#allocation8 + $0x8] sm:$0xf]
    %v1052 = vld [vmem:[#allocation8 + $0xc] sm:$0xf]
    %v1053 = vld [vmem:[#allocation8 + $0x10] sm:$0xf]
    %v1054 = vld [vmem:[#allocation8 + $0x14] sm:$0xf]
    %v1055 = vld [vmem:[#allocation8 + $0x18] sm:$0xf]
    %v1056 = vld [vmem:[#allocation8 + $0x1c] sm:$0xf]
    %v1057 = vld [vmem:[#allocation8 + $0x20] sm:$0xf]
    %v1058 = vld [vmem:[#allocation8 + $0x24] sm:$0xf]
    %v1059 = vld [vmem:[#allocation8 + $0x28] sm:$0xf]
    %v1060 = vld [vmem:[#allocation8 + $0x2c] sm:$0xf]
    %v1061 = vld [vmem:[#allocation8 + $0x30] sm:$0xf]
    %v1062 = vld [vmem:[#allocation8 + $0x34] sm:$0xf]
    %v1063 = vld [vmem:[#allocation8 + $0x38] sm:$0xf]
    %v1064 = vld [vmem:[#allocation8 + $0x3c] sm:$0xf]
    %v1065 = vld [vmem:[#allocation8 + $0x40] sm:$0xf]
    %v1066 = vld [vmem:[#allocation8 + $0x44] sm:$0xf]
    %v1067 = vld [vmem:[#allocation8 + $0x48] sm:$0xf]
    %v1068 = vld [vmem:[#allocation8 + $0x4c] sm:$0xf]
    %v1069 = vld [vmem:[#allocation8 + $0x50] sm:$0xf]
    %v1070 = vld [vmem:[#allocation8 + $0x54] sm:$0xf]
    %v1071 = vld [vmem:[#allocation8 + $0x58] sm:$0xf]
    %v1072 = vld [vmem:[#allocation8 + $0x5c] sm:$0xf]
    %v1073 = vld [vmem:[#allocation8 + $0x60] sm:$0xf]
    %v1074 = vld [vmem:[#allocation8 + $0x64] sm:$0xf]
    %v1075 = vld [vmem:[#allocation8 + $0x68] sm:$0xf]
    %v1076 = vld [vmem:[#allocation8 + $0x6c] sm:$0xf]
    %v1077 = vld [vmem:[#allocation8 + $0x70] sm:$0xf]
    %v1078 = vld [vmem:[#allocation8 + $0x74] sm:$0xf]
    %v1079 = vld [vmem:[#allocation8 + $0x78] sm:$0xf]
    %v1080 = vld [vmem:[#allocation8 + $0x7c] sm:$0xf]
    %v1081 = vld [vmem:[#allocation8 + $0x80] sm:$0xf]
    %v1082 = vld [vmem:[#allocation8 + $0x84] sm:$0xf]
    %v1083 = vld [vmem:[#allocation8 + $0x88] sm:$0xf]
    %v1084 = vld [vmem:[#allocation8 + $0x8c] sm:$0xf]
    %v1085 = vld [vmem:[#allocation8 + $0x90] sm:$0xf]
    %v1086 = vld [vmem:[#allocation8 + $0x94] sm:$0xf]
    %v1087 = vld [vmem:[#allocation8 + $0x98] sm:$0xf]
    %v1088 = vld [vmem:[#allocation8 + $0x9c] sm:$0xf]
    %v1089 = vld [vmem:[#allocation8 + $0xa0] sm:$0xf]
    %v1090 = vld [vmem:[#allocation8 + $0xa4] sm:$0xf]
    %v1091 = vld [vmem:[#allocation8 + $0xa8] sm:$0xf]
    %v1092 = vld [vmem:[#allocation8 + $0xac] sm:$0xf]
    %v1093 = vld [vmem:[#allocation8 + $0xb0] sm:$0xf]
    %v1094 = vld [vmem:[#allocation8 + $0xb4] sm:$0xf]
    %v1095 = vld [vmem:[#allocation8 + $0xb8] sm:$0xf]
    %v1096 = vld [vmem:[#allocation8 + $0xbc] sm:$0xf]
    %v1097 = vld [vmem:[#allocation8 + $0xc0] sm:$0xf]
    %v1098 = vld [vmem:[#allocation8 + $0xc4] sm:$0xf]
    %v1099 = vld [vmem:[#allocation8 + $0xc8] sm:$0xf]
    %v1100 = vld [vmem:[#allocation8 + $0xcc] sm:$0xf]
    %v1101 = vld [vmem:[#allocation8 + $0xd0] sm:$0xf]
    %v1102 = vld [vmem:[#allocation8 + $0xd4] sm:$0xf]
    %v1103 = vld [vmem:[#allocation8 + $0xd8] sm:$0xf]
    %v1104 = vld [vmem:[#allocation8 + $0xdc] sm:$0xf]
    %v1105 = vld [vmem:[#allocation8 + $0xe0] sm:$0xf]
    %v1106 = vld [vmem:[#allocation8 + $0xe4] sm:$0xf]
    %v1107 = vld [vmem:[#allocation8 + $0xe8] sm:$0xf]
    %v1108 = vld [vmem:[#allocation8 + $0xec] sm:$0xf]
    %v1109 = vld [vmem:[#allocation8 + $0xf0] sm:$0xf]
    %v1110 = vld [vmem:[#allocation8 + $0xf4] sm:$0xf]
    %v1111 = vld [vmem:[#allocation8 + $0xf8] sm:$0xf]
    %v1112 = vld [vmem:[#allocation8 + $0xfc] sm:$0xf]
    %v1113 = vunpack.c.l.bf16 %v1049
    %v1114 = vunpack.c.l.bf16 %v1050
    %v1115 = vunpack.c.l.bf16 %v1051
    %v1116 = vunpack.c.l.bf16 %v1052
    %v1117 = vunpack.c.l.bf16 %v1053
    %v1118 = vunpack.c.l.bf16 %v1054
    %v1119 = vunpack.c.l.bf16 %v1055
    %v1120 = vunpack.c.l.bf16 %v1056
    %v1121 = vunpack.c.l.bf16 %v1057
    %v1122 = vunpack.c.l.bf16 %v1058
    %v1123 = vunpack.c.l.bf16 %v1059
    %v1124 = vunpack.c.l.bf16 %v1060
    %v1125 = vunpack.c.l.bf16 %v1061
    %v1126 = vunpack.c.l.bf16 %v1062
    %v1127 = vunpack.c.l.bf16 %v1063
    %v1128 = vunpack.c.l.bf16 %v1064
    %v1129 = vunpack.c.l.bf16 %v1065
    %v1130 = vunpack.c.l.bf16 %v1066
    %v1131 = vunpack.c.l.bf16 %v1067
    %v1132 = vunpack.c.l.bf16 %v1068
    %v1133 = vunpack.c.l.bf16 %v1069
    %v1134 = vunpack.c.l.bf16 %v1070
    %v1135 = vunpack.c.l.bf16 %v1071
    %v1136 = vunpack.c.l.bf16 %v1072
    %v1137 = vunpack.c.l.bf16 %v1073
    %v1138 = vunpack.c.l.bf16 %v1074
    %v1139 = vunpack.c.l.bf16 %v1075
    %v1140 = vunpack.c.l.bf16 %v1076
    %v1141 = vunpack.c.l.bf16 %v1077
    %v1142 = vunpack.c.l.bf16 %v1078
    %v1143 = vunpack.c.l.bf16 %v1079
    %v1144 = vunpack.c.l.bf16 %v1080
    %v1145 = vunpack.c.l.bf16 %v1081
    %v1146 = vunpack.c.l.bf16 %v1082
    %v1147 = vunpack.c.l.bf16 %v1083
    %v1148 = vunpack.c.l.bf16 %v1084
    %v1149 = vunpack.c.l.bf16 %v1085
    %v1150 = vunpack.c.l.bf16 %v1086
    %v1151 = vunpack.c.l.bf16 %v1087
    %v1152 = vunpack.c.l.bf16 %v1088
    %v1153 = vunpack.c.l.bf16 %v1089
    %v1154 = vunpack.c.l.bf16 %v1090
    %v1155 = vunpack.c.l.bf16 %v1091
    %v1156 = vunpack.c.l.bf16 %v1092
    %v1157 = vunpack.c.l.bf16 %v1093
    %v1158 = vunpack.c.l.bf16 %v1094
    %v1159 = vunpack.c.l.bf16 %v1095
    %v1160 = vunpack.c.l.bf16 %v1096
    %v1161 = vunpack.c.l.bf16 %v1097
    %v1162 = vunpack.c.l.bf16 %v1098
    %v1163 = vunpack.c.l.bf16 %v1099
    %v1164 = vunpack.c.l.bf16 %v1100
    %v1165 = vunpack.c.l.bf16 %v1101
    %v1166 = vunpack.c.l.bf16 %v1102
    %v1167 = vunpack.c.l.bf16 %v1103
    %v1168 = vunpack.c.l.bf16 %v1104
    %v1169 = vunpack.c.l.bf16 %v1105
    %v1170 = vunpack.c.l.bf16 %v1106
    %v1171 = vunpack.c.l.bf16 %v1107
    %v1172 = vunpack.c.l.bf16 %v1108
    %v1173 = vunpack.c.l.bf16 %v1109
    %v1174 = vunpack.c.l.bf16 %v1110
    %v1175 = vunpack.c.l.bf16 %v1111
    %v1176 = vunpack.c.l.bf16 %v1112
    %v1177 = vld [vmem:[%s5] sm:$0x1]
    %v1179 = vlaneseq
    %v1180 = vshrl.u32 %v1179, 7
    %v1181 = vsub.s32 0, %v1180
    %v1182 = vrot.slane %v1177, %v1181
    %1184 = vmatprep.subr.mxu0 0.0
    %1185 = vmatpush1.msra.mxu0 %v1128
    %1186 = vmatprep.subr.mxu0 0.0
    %1187 = vmatpush1.msra.mxu0 %v1127
    %1188 = vmatprep.subr.mxu0 0.0
    %1189 = vmatpush1.msra.mxu0 %v1126
    %1190 = vmatprep.subr.mxu0 0.0
    %1191 = vmatpush1.msra.mxu0 %v1125
    %1192 = vmatprep.subr.mxu0 0.0
    %1193 = vmatpush1.msra.mxu0 %v1124
    %1194 = vmatprep.subr.mxu0 0.0
    %1195 = vmatpush1.msra.mxu0 %v1123
    %1196 = vmatprep.subr.mxu0 0.0
    %1197 = vmatpush1.msra.mxu0 %v1122
    %1198 = vmatprep.subr.mxu0 0.0
    %1199 = vmatpush1.msra.mxu0 %v1121
    %1200 = vmatprep.subr.mxu0 0.0
    %1201 = vmatpush1.msra.mxu0 %v1120
    %1202 = vmatprep.subr.mxu0 0.0
    %1203 = vmatpush1.msra.mxu0 %v1119
    %1204 = vmatprep.subr.mxu0 0.0
    %1205 = vmatpush1.msra.mxu0 %v1118
    %1206 = vmatprep.subr.mxu0 0.0
    %1207 = vmatpush1.msra.mxu0 %v1117
    %1208 = vmatprep.subr.mxu0 0.0
    %1209 = vmatpush1.msra.mxu0 %v1116
    %1210 = vmatprep.subr.mxu0 0.0
    %1211 = vmatpush1.msra.mxu0 %v1115
    %1212 = vmatprep.subr.mxu0 0.0
    %1213 = vmatpush1.msra.mxu0 %v1114
    %1214 = vmatprep.subr.mxu0 0.0
    %1215 = vmatpush1.msra.mxu0 %v1113
    %1216 = vmatprep.subr.mxu0 0.0
    %1217 = vmatpush2.msra.mxu0 %v1144
    %1218 = vmatprep.subr.mxu0 0.0
    %1219 = vmatpush2.msra.mxu0 %v1143
    %1220 = vmatprep.subr.mxu0 0.0
    %1221 = vmatpush2.msra.mxu0 %v1142
    %1222 = vmatprep.subr.mxu0 0.0
    %1223 = vmatpush2.msra.mxu0 %v1141
    %1224 = vmatprep.subr.mxu0 0.0
    %1225 = vmatpush2.msra.mxu0 %v1140
    %1226 = vmatprep.subr.mxu0 0.0
    %1227 = vmatpush2.msra.mxu0 %v1139
    %1228 = vmatprep.subr.mxu0 0.0
    %1229 = vmatpush2.msra.mxu0 %v1138
    %1230 = vmatprep.subr.mxu0 0.0
    %1231 = vmatpush2.msra.mxu0 %v1137
    %1232 = vmatprep.subr.mxu0 0.0
    %1233 = vmatpush2.msra.mxu0 %v1136
    %1234 = vmatprep.subr.mxu0 0.0
    %1235 = vmatpush2.msra.mxu0 %v1135
    %1236 = vmatprep.subr.mxu0 0.0
    %1237 = vmatpush2.msra.mxu0 %v1134
    %1238 = vmatprep.subr.mxu0 0.0
    %1239 = vmatpush2.msra.mxu0 %v1133
    %1240 = vmatprep.subr.mxu0 0.0
    %1241 = vmatpush2.msra.mxu0 %v1132
    %1242 = vmatprep.subr.mxu0 0.0
    %1243 = vmatpush2.msra.mxu0 %v1131
    %1244 = vmatprep.subr.mxu0 0.0
    %1245 = vmatpush2.msra.mxu0 %v1130
    %1246 = vmatprep.subr.mxu0 0.0
    %1247 = vmatpush2.msra.mxu0 %v1129
    %1248 = vmatprep.mubr.f32.mxu0 %v1046
    %1249 = vmatmul.mubr.f32.gmra.mxu0 %v1045
    %v1250 = vpop.f32.mrf.mxu0
    %v1251 = vadd.f32 %v1182, %v1250
    %v1252 = vpop.f32.mrf.mxu0
    %1253 = vdwg.mxu0
    %1254 = vmatprep.subr.mxu0 0.0
    %1255 = vmatpush1.msra.mxu0 %v1160
    %1256 = vmatprep.subr.mxu0 0.0
    %1257 = vmatpush1.msra.mxu0 %v1159
    %1258 = vmatprep.subr.mxu0 0.0
    %1259 = vmatpush1.msra.mxu0 %v1158
    %1260 = vmatprep.subr.mxu0 0.0
    %1261 = vmatpush1.msra.mxu0 %v1157
    %1262 = vmatprep.subr.mxu0 0.0
    %1263 = vmatpush1.msra.mxu0 %v1156
    %1264 = vmatprep.subr.mxu0 0.0
    %1265 = vmatpush1.msra.mxu0 %v1155
    %1266 = vmatprep.subr.mxu0 0.0
    %1267 = vmatpush1.msra.mxu0 %v1154
    %1268 = vmatprep.subr.mxu0 0.0
    %1269 = vmatpush1.msra.mxu0 %v1153
    %1270 = vmatprep.subr.mxu0 0.0
    %1271 = vmatpush1.msra.mxu0 %v1152
    %1272 = vmatprep.subr.mxu0 0.0
    %1273 = vmatpush1.msra.mxu0 %v1151
    %1274 = vmatprep.subr.mxu0 0.0
    %1275 = vmatpush1.msra.mxu0 %v1150
    %1276 = vmatprep.subr.mxu0 0.0
    %1277 = vmatpush1.msra.mxu0 %v1149
    %1278 = vmatprep.subr.mxu0 0.0
    %1279 = vmatpush1.msra.mxu0 %v1148
    %1280 = vmatprep.subr.mxu0 0.0
    %1281 = vmatpush1.msra.mxu0 %v1147
    %1282 = vmatprep.subr.mxu0 0.0
    %1283 = vmatpush1.msra.mxu0 %v1146
    %1284 = vmatprep.subr.mxu0 0.0
    %1285 = vmatpush1.msra.mxu0 %v1145
    %1286 = vmatprep.subr.mxu0 0.0
    %1287 = vmatpush2.msra.mxu0 %v1176
    %1288 = vmatprep.subr.mxu0 0.0
    %1289 = vmatpush2.msra.mxu0 %v1175
    %1290 = vmatprep.subr.mxu0 0.0
    %1291 = vmatpush2.msra.mxu0 %v1174
    %1292 = vmatprep.subr.mxu0 0.0
    %1293 = vmatpush2.msra.mxu0 %v1173
    %1294 = vmatprep.subr.mxu0 0.0
    %1295 = vmatpush2.msra.mxu0 %v1172
    %1296 = vmatprep.subr.mxu0 0.0
    %1297 = vmatpush2.msra.mxu0 %v1171
    %1298 = vmatprep.subr.mxu0 0.0
    %1299 = vmatpush2.msra.mxu0 %v1170
    %1300 = vmatprep.subr.mxu0 0.0
    %1301 = vmatpush2.msra.mxu0 %v1169
    %1302 = vmatprep.subr.mxu0 0.0
    %1303 = vmatpush2.msra.mxu0 %v1168
    %1304 = vmatprep.subr.mxu0 0.0
    %1305 = vmatpush2.msra.mxu0 %v1167
    %1306 = vmatprep.subr.mxu0 0.0
    %1307 = vmatpush2.msra.mxu0 %v1166
    %1308 = vmatprep.subr.mxu0 0.0
    %1309 = vmatpush2.msra.mxu0 %v1165
    %1310 = vmatprep.subr.mxu0 0.0
    %1311 = vmatpush2.msra.mxu0 %v1164
    %1312 = vmatprep.subr.mxu0 0.0
    %1313 = vmatpush2.msra.mxu0 %v1163
    %1314 = vmatprep.subr.mxu0 0.0
    %1315 = vmatpush2.msra.mxu0 %v1162
    %1316 = vmatprep.subr.mxu0 0.0
    %1317 = vmatpush2.msra.mxu0 %v1161
    %1318 = vmatprep.mubr.f32.mxu0 %v1048
    %1319 = vmatmul.mubr.f32.gmra.mxu0 %v1047
    %v1320 = vpop.f32.mrf.mxu0
    %v1321 = vadd.f32 %v1251, %v1320
    %v1322 = vpop.f32.mrf.mxu0
    %1323 = vdwg.mxu0
    %1324 = vst [vmem:[#allocation10] sm:$0xff] %v1321
    // Predicated region
    $region42: #{medclip_mlp_classifier.1} parent=1 // pred_check
      _
    $region43: #{medclip_mlp_classifier.1} parent=1 // pred_check_branch
      %1326 = sbr.rel (0) target = $region45
    $region44: #{medclip_mlp_classifier.1} parent=1 // pred_region
      %s1328 = ssub.s32 128, 128
      %1329 = vsyncadd [#allocation4], %s1328
      %s1331 = sshll.u32 [#allocation10], 4
      %s1332 = int_to_ptr.vmem [resolvable:$true] %s1331
      %1334 = dma.vmem_to_hbm [thread:$0]  %s1332, 128, %s6, [#allocation4]
    $region45: #{medclip_mlp_classifier.1} parent=1 // pred_fallthru
      _
    // Predicated region
    $region46: #{medclip_mlp_classifier.1} parent=1 // pred_check
      _
    $region47: #{medclip_mlp_classifier.1} parent=1 // pred_check_branch
      %1336 = sbr.rel (0) target = $region49
    $region48: #{medclip_mlp_classifier.1} parent=1 // pred_region
      %1337 = dma.done [#allocation4], 128
    $region49: #{medclip_mlp_classifier.1} parent=1 // pred_fallthru
      _
    %1338 = vsyncpa [#allocation3], 1
    %1339 = vsyncpa [#allocation6], 1
    %1340 = vsyncpa [#allocation9], 1
    %1341 = vsyncpa [#allocation4], 1

</llo_original>
